<compile_context>
chip_gen: v7x
topology: tpu7x:2x2x1
jax: 0.10.0
libtpu: 0.0.40
codegen_flags: <defaults>
</compile_context>

<pallas_src>
import functools

import jax
import jax.numpy as jnp
from jax.experimental import pallas as pl
from jax.experimental.pallas import tpu as pltpu


def _round_up(x: int, m: int) -> int:
    return (x + m - 1) // m * m


def _vmem_capacity_bytes() -> int:
    """Physical VMEM per TensorCore (generation-aware); conservative fallback."""
    try:
        cap = int(getattr(pltpu.get_tpu_info(), "vmem_capacity_bytes"))
        if cap > 0:
            return cap
    except Exception:
        pass
    return 64 * 1024 * 1024  # v7x per-TC VMEM (most restrictive generation)


def _choose_batch_tile(steps: int, batch: int, itemsize: int,
                       vmem_budget_bytes: int) -> int:
    """Lane tile (multiple of 128).

    Per-lane VMEM cost = double-buffered native-dtype input block + resident
    f32 accumulator = steps * (2*itemsize + 4) bytes.  The streamed input block
    itself is kept in the measured 2-8 MiB sweet spot (85%+ of HBM roofline).
    """
    bytes_per_lane = max(1, steps * (2 * itemsize + 4))
    budget_lanes = max(128, (vmem_budget_bytes // bytes_per_lane) // 128 * 128)
    block_cap_lanes = max(
        128, ((8 * 1024 * 1024) // max(1, steps * itemsize)) // 128 * 128)
    return max(128, min(_round_up(batch, 128), budget_lanes, block_cap_lanes))


def _kl_reg_kernel(pg_ref, p_ref, out_ref, acc_ref, *, batch, tile_b, inv_batch):
    """One batch tile.

    pg_ref : (S, 1)      f32 VMEM  -- geometric prior (resident, constant map)
    p_ref  : (S, TB)     VMEM tile -- halting distribution, native dtype
    out_ref: (1, 1)      f32 SMEM  -- final result, already scaled by -1/B
    acc_ref: (S, TB)     f32 VMEM scratch -- elementwise log(p) accumulator

    Hot loop = vld + cast + log (EUP) + VPU add.  All reductions / weighting /
    scalar traffic are deferred to the last grid step.
    """
    j = pl.program_id(0)
    last = pl.num_programs(0) - 1

    @pl.when(j == 0)
    def _init():
        acc_ref[...] = jnp.zeros_like(acc_ref)

    ragged = (batch % tile_b) != 0
    if ragged:
        @pl.when(j != last)
        def _interior():  # interior tiles: no masking work at all
            acc_ref[...] += jnp.log(p_ref[...].astype(jnp.float32))

        @pl.when(j == last)
        def _edge():
            # Mask padded lanes to 1.0 BEFORE the log (log(1) == 0), so garbage
            # in the out-of-bounds part of the block never hits the EUP.
            col = j * tile_b + jax.lax.broadcasted_iota(jnp.int32, (1, tile_b), 1)
            p_t = jnp.where(col < batch, p_ref[...].astype(jnp.float32),
                            jnp.float32(1.0))
            acc_ref[...] += jnp.log(p_t)
    else:
        acc_ref[...] += jnp.log(p_ref[...].astype(jnp.float32))

    @pl.when(j == last)
    def _finalize():
        acc = acc_ref[...]                                  # (S, TB) f32
        row_sum = jnp.sum(acc, axis=1, keepdims=True)       # (S, 1) one XLU pass
        pg = pg_ref[...]                                    # (S, 1)
        # PyTorch kl_div rule: rows with target p_g == 0 contribute exactly 0.
        total = jnp.sum(jnp.where(pg > 0.0, pg * row_sum, jnp.float32(0.0)))
        out_ref[0, 0] = total * jnp.float32(-inv_batch)


def make_geometric_prior(lambda_p: float, max_steps: int) -> jnp.ndarray:
    """p_g[k] = lambda_p * (1 - lambda_p)^k  (the module's fixed parameter)."""
    k = jnp.arange(max_steps, dtype=jnp.float32)
    return jnp.float32(lambda_p) * jnp.power(jnp.float32(1.0 - lambda_p), k)


def _reg_loss_ref(p, p_g):
    """Pure-jnp reference / small-shape fallback (PyTorch KLDivLoss batchmean)."""
    steps, batch = p.shape
    pg = p_g[:steps].astype(jnp.float32)[:, None]
    log_p = jnp.log(p.astype(jnp.float32))
    pw = jnp.where(pg > 0.0, pg * (jnp.log(pg) - log_p), 0.0)
    return jnp.sum(pw) * jnp.float32(1.0 / batch)


@functools.partial(jax.jit, static_argnames=("use_pallas", "tile_b_override"))
def regularization_loss(p, p_g, use_pallas=None, tile_b_override=None):
    """p: (steps, batch) halting distribution.  p_g: (max_steps,) prior."""
    steps, batch = p.shape

    if use_pallas is None:
        # Crossover re-tuned per review: fused XLA elementwise+reduce wins over
        # pallas_call dispatch overhead until roughly 0.5M elements; also need
        # enough lanes that the vreg lane dim isn't mostly padding.
        use_pallas = (steps * batch >= (1 << 19)) and (batch >= 256)
    if not use_pallas:
        return _reg_loss_ref(p, p_g)

    pg = p_g[:steps].astype(jnp.float32)
    pg_col = pg.reshape(steps, 1)
    # Prior-entropy constant term, computed once outside the kernel (tiny).
    const = jnp.sum(jnp.where(pg > 0.0, pg * jnp.log(pg), 0.0))

    itemsize = jnp.dtype(p.dtype).itemsize
    vmem_cap = _vmem_capacity_bytes()
    # Generation-aware budget: <=48 MiB of live blocks on v7x (64 MiB physical),
    # up to 64 MiB on v5e/v6e (128 MiB physical).
    vmem_budget = max(16 << 20, min(vmem_cap - (16 << 20), 64 << 20))

    if tile_b_override is not None:
        tile_b = max(128, _round_up(int(tile_b_override), 128))
    else:
        tile_b = _choose_batch_tile(steps, batch, itemsize, vmem_budget)
    num_tiles = -(-batch // tile_b)

    block_bytes = steps * tile_b * itemsize            # streamed input block
    acc_bytes = steps * tile_b * 4                     # resident f32 accumulator
    pg_bytes = 2 * _round_up(steps, 8) * 128 * 4       # padded pg tile (x2)
    vmem_limit = 2 * block_bytes + acc_bytes + pg_bytes + (1 << 20)
    vmem_limit = int(max(4 << 20, min(vmem_limit, vmem_cap - (8 << 20))))

    kernel = functools.partial(_kl_reg_kernel, batch=batch, tile_b=tile_b,
                               inv_batch=1.0 / batch)

    # TODO(synk): v7x only — shard the batch-tile axis across the 2 TensorCores
    # (leading CORE_PARALLEL grid axis, per-core partial sums combined in the
    # wrapper) for ~2x when EUP-bound; skipped to keep single-TC v5e/v6e
    # codegen/compilation unchanged.
    # TODO(synk): v6e bf16 with steps < 16 — if profiling shows vld/unpack (not
    # EUP) binding, reshape (S, B) -> (2S, B/2) in the wrapper (pg repeated 2x)
    # to fill packed (16, 128) bf16 vregs.
    weighted = pl.pallas_call(
        kernel,
        out_shape=jax.ShapeDtypeStruct((1, 1), jnp.float32),
        grid_spec=pltpu.PrefetchScalarGridSpec(
            num_scalar_prefetch=0,
            grid=(num_tiles,),
            in_specs=[
                pl.BlockSpec((steps, 1), lambda j: (0, 0)),       # p_g (resident)
                pl.BlockSpec((steps, tile_b), lambda j: (0, j)),  # p (streamed)
            ],
            out_specs=pl.BlockSpec(memory_space=pltpu.SMEM),      # scalar result
            scratch_shapes=[pltpu.VMEM((steps, tile_b), jnp.float32)],
        ),
        compiler_params=pltpu.CompilerParams(
            dimension_semantics=("arbitrary",),   # reduction over batch tiles
            vmem_limit_bytes=vmem_limit,
        ),
        cost_estimate=pl.CostEstimate(
            flops=2 * steps * batch + 4 * steps,
            transcendentals=steps * batch,
            bytes_accessed=steps * batch * itemsize + steps * 4 + 4,
        ),
    )(pg_col, p)

    # loss = sum_k pg*log(pg) - (1/B)*sum_{k,b} pg*log(p); the kernel already
    # returned the second term scaled by -1/B.
    return const + weighted[0, 0]


if __name__ == "__main__":
    lambda_p = 0.2
    max_steps = 1000

    p_g = make_geometric_prior(lambda_p, max_steps)
    key = jax.random.PRNGKey(0)
    k1, k2 = jax.random.split(key)

    # --- Pallas path: bf16 halting distribution, single large batch tile.
    steps, batch = 8, 1152
    raw = jax.random.uniform(k1, (steps, batch), dtype=jnp.float32,
                             minval=0.1, maxval=1.0)
    p = (raw / jnp.sum(raw, axis=0, keepdims=True)).astype(jnp.bfloat16)

    ref = _reg_loss_ref(p, p_g)

    loss = regularization_loss(p, p_g, use_pallas=True)
    jax.block_until_ready(loss)
    assert jnp.isfinite(loss), loss
    assert jnp.allclose(loss, ref, rtol=1e-4, atol=1e-4), (loss, ref)

    # --- Pallas path, forced small tile: exercises multi-tile accumulation and
    # the pl.when-gated ragged-edge mask (1152 = 2*512 + 128).
    loss_mt = regularization_loss(p, p_g, use_pallas=True, tile_b_override=512)
    jax.block_until_ready(loss_mt)
    assert jnp.isfinite(loss_mt), loss_mt
    assert jnp.allclose(loss_mt, ref, rtol=1e-4, atol=1e-4), (loss_mt, ref)
    assert jnp.allclose(loss_mt, loss, rtol=1e-4, atol=1e-4), (loss_mt, loss)

    # --- Tiny-shape path (module's typical input): dispatches to fused XLA.
    steps2, batch2 = 8, 4
    raw2 = jax.random.uniform(k2, (steps2, batch2), dtype=jnp.float32,
                              minval=0.1, maxval=1.0)
    p2 = raw2 / jnp.sum(raw2, axis=0, keepdims=True)
    loss2 = regularization_loss(p2, p_g)
    jax.block_until_ready(loss2)
    ref2 = _reg_loss_ref(p2, p_g)
    assert jnp.allclose(loss2, ref2, rtol=1e-5, atol=1e-6), (loss2, ref2)

    print("KERNEL_OK")
</pallas_src>

<mosaic_0001>
module attributes {stable_mosaic.version = 11 : i64} {
  func.func @_kl_reg_kernel(%arg0: i32, %arg1: memref<8x1xf32, #tpu.memory_space<vmem>>, %arg2: memref<8x1152xbf16, #tpu.memory_space<vmem>>, %arg3: memref<1x1xf32, #tpu.memory_space<smem>>, %arg4: memref<8x1152xf32, #tpu.memory_space<vmem>>) attributes {dimension_semantics = [#tpu.dimension_semantics<arbitrary>], iteration_bounds = array<i64: 1>, scalar_prefetch = 0 : i64, scratch_operands = 1 : i64, tpu.core_type = #tpu.core_type<tc>, window_params = [{pipeline_mode = #tpu.pipeline_mode<synchronous>, transform_indices = @transform_0, window_bounds = array<i64: 8, 1>}, {transform_indices = @transform_1, window_bounds = array<i64: 8, 1152>}, {transform_indices = @transform_2, window_bounds = array<i64: 1, 1>}]} {
    %c0_i32 = arith.constant 0 : i32
    %0 = arith.cmpi eq, %arg0, %c0_i32 : i32
    %1 = arith.extui %0 : i1 to i32
    %c0_i32_0 = arith.constant 0 : i32
    %2 = arith.cmpi ne, %1, %c0_i32_0 : i32
    scf.if %2 {
      %cst = arith.constant 0.000000e+00 : f32
      %12 = vector.broadcast %cst : f32 to vector<8x1152xf32>
      %c0_8 = arith.constant 0 : index
      %c0_9 = arith.constant 0 : index
      %13 = vector.load %arg4[%c0_8, %c0_9] : memref<8x1152xf32, #tpu.memory_space<vmem>>, vector<8x1152xf32>
      tpu.vector_store %arg4[%c0_8, %c0_9], %12 {strides = array<i32>} : memref<8x1152xf32, #tpu.memory_space<vmem>>, vector<8x1152xf32>,
    } else {
    }
    %c0 = arith.constant 0 : index
    %c0_1 = arith.constant 0 : index
    %3 = vector.load %arg4[%c0, %c0_1] : memref<8x1152xf32, #tpu.memory_space<vmem>>, vector<8x1152xf32>
    %c0_2 = arith.constant 0 : index
    %c0_3 = arith.constant 0 : index
    %4 = vector.load %arg2[%c0_2, %c0_3] : memref<8x1152xbf16, #tpu.memory_space<vmem>>, vector<8x1152xbf16>
    %5 = arith.extf %4 : vector<8x1152xbf16> to vector<8x1152xf32>
    %6 = math.log %5 : vector<8x1152xf32>
    %7 = arith.addf %3, %6 : vector<8x1152xf32>
    %c0_4 = arith.constant 0 : index
    %c0_5 = arith.constant 0 : index
    %8 = vector.load %arg4[%c0_4, %c0_5] : memref<8x1152xf32, #tpu.memory_space<vmem>>, vector<8x1152xf32>
    tpu.vector_store %arg4[%c0_4, %c0_5], %7 {strides = array<i32>} : memref<8x1152xf32, #tpu.memory_space<vmem>>, vector<8x1152xf32>,
    %c0_i32_6 = arith.constant 0 : i32
    %9 = arith.cmpi eq, %arg0, %c0_i32_6 : i32
    %10 = arith.extui %9 : i1 to i32
    %c0_i32_7 = arith.constant 0 : i32
    %11 = arith.cmpi ne, %10, %c0_i32_7 : i32
    scf.if %11 {
      %c0_8 = arith.constant 0 : index
      %c0_9 = arith.constant 0 : index
      %12 = vector.load %arg4[%c0_8, %c0_9] : memref<8x1152xf32, #tpu.memory_space<vmem>>, vector<8x1152xf32>
      %cst = arith.constant dense<0.000000e+00> : vector<8xf32>
      %13 = vector.multi_reduction <add>, %12, %cst [1] : vector<8x1152xf32> to vector<8xf32>
      %14 = vector.shape_cast %13 : vector<8xf32> to vector<8x1xf32>
      %c0_10 = arith.constant 0 : index
      %c0_11 = arith.constant 0 : index
      %15 = vector.load %arg1[%c0_10, %c0_11] : memref<8x1xf32, #tpu.memory_space<vmem>>, vector<8x1xf32>
      %cst_12 = arith.constant 0.000000e+00 : f32
      %16 = vector.broadcast %cst_12 : f32 to vector<8x1xf32>
      %17 = arith.cmpf ogt, %15, %16 : vector<8x1xf32>
      %18 = arith.mulf %15, %14 : vector<8x1xf32>
      %cst_13 = arith.constant 0.000000e+00 : f32
      %19 = vector.broadcast %cst_13 : f32 to vector<8x1xf32>
      %20 = arith.select %17, %18, %19 : vector<8x1xi1>, vector<8x1xf32>
      %21 = vector.shape_cast %20 : vector<8x1xf32> to vector<1x8x1xf32>
      %cst_14 = arith.constant dense<0.000000e+00> : vector<1xf32>
      %22 = vector.multi_reduction <add>, %21, %cst_14 [1, 2] : vector<1x8x1xf32> to vector<1xf32>
      %23 = vector.shape_cast %22 : vector<1xf32> to vector<1x1x1xf32>
      %24 = vector.extract %23[0, 0, 0] : f32 from vector<1x1x1xf32>
      %cst_15 = arith.constant -8.68055562E-4 : f32
      %25 = arith.mulf %24, %cst_15 : f32
      %c0_16 = arith.constant 0 : index
      %c0_17 = arith.constant 0 : index
      %26 = memref.load %arg3[%c0_16, %c0_17] : memref<1x1xf32, #tpu.memory_space<smem>>
      memref.store %25, %arg3[%c0_16, %c0_17] : memref<1x1xf32, #tpu.memory_space<smem>>
    } else {
    }
    return
  }
  func.func @transform_0(%arg0: i32) -> (i32, i32) {
    %c0_i32 = arith.constant 0 : i32
    %c0_i32_0 = arith.constant 0 : i32
    %c0_i32_1 = arith.constant 0 : i32
    return %c0_i32, %c0_i32_0 : i32, i32
  }
  func.func @transform_1(%arg0: i32) -> (i32, i32) {
    %c0_i32 = arith.constant 0 : i32
    %c0_i32_0 = arith.constant 0 : i32
    return %c0_i32, %arg0 : i32, i32
  }
  func.func @transform_2(%arg0: i32) -> (i32, i32) {
    %c0_i32 = arith.constant 0 : i32
    %c0_i32_0 = arith.constant 0 : i32
    %c0_i32_1 = arith.constant 0 : i32
    return %c0_i32, %c0_i32_0 : i32, i32
  }
}

</mosaic_0001>

<llo_original>
// kernel: regularization_loss.1
$region0: #{regularization_loss.1}
  #allocation0 [shape = 'u32[]', space=smem, size = 0x4, offset = 0x4, fixed_abs, tag = 'smem constant byte address 0x4 - core index']
  #allocation1 [shape = 'u32[144,128]{1,0:T(1,128)}', space=vmem, size = 0x12000, scoped, tag = 'internal scratch']
  #allocation2 [shape = 'f32[8,1152]{1,0:T(8,128)}', space=vmem, size = 0x9000, scoped, tag = 'scratch operand']
  %s0 = inlined_call_operand.vmem [shape: f32[8,1], index: 0, kind: input, shape index: {}]
  %s1 = inlined_call_operand.hbm [shape: bf16[8,1152], index: 1, kind: input, shape index: {}]
  %s2 = inlined_call_operand.hbm [shape: f32[1,1], index: 2, kind: output, shape index: {}]
  %s3 = sld [smem:[#allocation0]]
  $region30: #{regularization_loss.1} parent=0
    _
  %s5 = ssub.s32 1, %s3
  %s6 = scalar_select 0, %s5, %s3
  $region1: #{regularization_loss.1} parent=0
    #allocation3 [shape = 'u8[18432]{0}', space=vmem, size = 0x4800, scoped, tag = 'input window, operand 1, single buffered']
    #allocation4 [shape = 's32[1]{0}', space=sflag, size = 0x4, scoped, tag = 'scoped memory for regularization_loss.1']
    #allocation5 [shape = 's32[1]{0}', space=sflag, size = 0x4, scoped, tag = 'scoped memory for regularization_loss.1']
    #allocation6 [shape = 'u8[512]{0}', space=smem, size = 0x200, scoped, tag = 'output window, operand 0, single buffered']
    %7 = vsyncpa [#allocation4], 0
    %8 = vsyncpa [#allocation5], 0
    // Predicated region
    $region2: #{regularization_loss.1} parent=1 // pred_check
      _
    $region3: #{regularization_loss.1} parent=1 // pred_check_branch
      %10 = sbr.rel (0) target = $region5
    $region4: #{regularization_loss.1} parent=1 // pred_region
      _
    $region5: #{regularization_loss.1} parent=1 // pred_fallthru
      _
    // Predicated region
    $region6: #{regularization_loss.1} parent=1 // pred_check
      _
    $region7: #{regularization_loss.1} parent=1 // pred_check_branch
      %12 = sbr.rel (0) target = $region9
    $region8: #{regularization_loss.1} parent=1 // pred_region
      %s14 = ssub.s32 576, 576
      %15 = vsyncadd [#allocation4], %s14
      %s17 = sshll.u32 [#allocation3], 4
      %s18 = int_to_ptr.vmem [resolvable:$true] %s17
      %20 = dma.hbm_to_vmem [thread:$0]  %s1, 576, %s18, [#allocation4]
    $region9: #{regularization_loss.1} parent=1 // pred_fallthru
      _
    // Predicated region
    $region10: #{regularization_loss.1} parent=1 // pred_check
      _
    $region11: #{regularization_loss.1} parent=1 // pred_check_branch
      %22 = sbr.rel (0) target = $region13
    $region12: #{regularization_loss.1} parent=1 // pred_region
      %23 = dma.done [#allocation4], 576
    $region13: #{regularization_loss.1} parent=1 // pred_fallthru
      _
    %p24 = scmp.eq.s32.totalorder 0, 0
    // Predicated region
    $region14: #{regularization_loss.1} parent=1 // pred_check
      %p25 = pneg %p24
    $region15: #{regularization_loss.1} parent=1 // pred_check_branch
      %27 = sbr.rel (%p25) target = $region17
    $region16: #{regularization_loss.1} parent=1 // pred_region
      %28 = vst [vmem:[#allocation2] sm:$0xff] 0.0
      %29 = vst [vmem:[#allocation2 + $0x8] sm:$0xff] 0.0
      %30 = vst [vmem:[#allocation2 + $0x10] sm:$0xff] 0.0
      %31 = vst [vmem:[#allocation2 + $0x18] sm:$0xff] 0.0
      %32 = vst [vmem:[#allocation2 + $0x20] sm:$0xff] 0.0
      %33 = vst [vmem:[#allocation2 + $0x28] sm:$0xff] 0.0
      %34 = vst [vmem:[#allocation2 + $0x30] sm:$0xff] 0.0
      %35 = vst [vmem:[#allocation2 + $0x38] sm:$0xff] 0.0
      %36 = vst [vmem:[#allocation2 + $0x40] sm:$0xff] 0.0
    $region17: #{regularization_loss.1} parent=1 // pred_fallthru
      _
    %v37 = vld [vmem:[#allocation2] sm:$0xff]
    %v38 = vld [vmem:[#allocation2 + $0x8] sm:$0xff]
    %v39 = vld [vmem:[#allocation2 + $0x10] sm:$0xff]
    %v40 = vld [vmem:[#allocation2 + $0x18] sm:$0xff]
    %v41 = vld [vmem:[#allocation2 + $0x20] sm:$0xff]
    %v42 = vld [vmem:[#allocation2 + $0x28] sm:$0xff]
    %v43 = vld [vmem:[#allocation2 + $0x30] sm:$0xff]
    %v44 = vld [vmem:[#allocation2 + $0x38] sm:$0xff]
    %v45 = vld [vmem:[#allocation2 + $0x40] sm:$0xff]
    %v46 = vld [vmem:[#allocation3] sm:$0xff]
    %v47 = vld [vmem:[#allocation3 + $0x8] sm:$0xff]
    %v48 = vld [vmem:[#allocation3 + $0x10] sm:$0xff]
    %v49 = vld [vmem:[#allocation3 + $0x18] sm:$0xff]
    %v50 = vld [vmem:[#allocation3 + $0x20] sm:$0xf]
    %v51 = vunpack.c.l.bf16 %v46
    %v52 = vunpack.c.h.bf16 %v46
    %v53 = vunpack.c.l.bf16 %v47
    %v54 = vunpack.c.h.bf16 %v47
    %v55 = vunpack.c.l.bf16 %v48
    %v56 = vunpack.c.h.bf16 %v48
    %v57 = vunpack.c.l.bf16 %v49
    %v58 = vunpack.c.h.bf16 %v49
    %v59 = vunpack.c.l.bf16 %v50
    %v60 = vlog2.pop %v51
    %v61 = vmul.f32 %v60, 0.6931472
    %v62 = vlog2.pop %v52
    %v63 = vmul.f32 %v62, 0.6931472
    %v64 = vlog2.pop %v53
    %v65 = vmul.f32 %v64, 0.6931472
    %v66 = vlog2.pop %v54
    %v67 = vmul.f32 %v66, 0.6931472
    %v68 = vlog2.pop %v55
    %v69 = vmul.f32 %v68, 0.6931472
    %v70 = vlog2.pop %v56
    %v71 = vmul.f32 %v70, 0.6931472
    %v72 = vlog2.pop %v57
    %v73 = vmul.f32 %v72, 0.6931472
    %v74 = vlog2.pop %v58
    %v75 = vmul.f32 %v74, 0.6931472
    %v76 = vlog2.pop %v59
    %v77 = vmul.f32 %v76, 0.6931472
    %v78 = vadd.f32 %v37, %v61
    %v79 = vadd.f32 %v38, %v63
    %v80 = vadd.f32 %v39, %v65
    %v81 = vadd.f32 %v40, %v67
    %v82 = vadd.f32 %v41, %v69
    %v83 = vadd.f32 %v42, %v71
    %v84 = vadd.f32 %v43, %v73
    %v85 = vadd.f32 %v44, %v75
    %v86 = vadd.f32 %v45, %v77
    %87 = vst [vmem:[#allocation2] sm:$0xff] %v78
    %88 = vst [vmem:[#allocation2 + $0x8] sm:$0xff] %v79
    %89 = vst [vmem:[#allocation2 + $0x10] sm:$0xff] %v80
    %90 = vst [vmem:[#allocation2 + $0x18] sm:$0xff] %v81
    %91 = vst [vmem:[#allocation2 + $0x20] sm:$0xff] %v82
    %92 = vst [vmem:[#allocation2 + $0x28] sm:$0xff] %v83
    %93 = vst [vmem:[#allocation2 + $0x30] sm:$0xff] %v84
    %94 = vst [vmem:[#allocation2 + $0x38] sm:$0xff] %v85
    %95 = vst [vmem:[#allocation2 + $0x40] sm:$0xff] %v86
    // Predicated region
    $region18: #{regularization_loss.1} parent=1 // pred_check
      %p96 = pneg %p24
    $region19: #{regularization_loss.1} parent=1 // pred_check_branch
      %98 = sbr.rel (%p96) target = $region21
    $region20: #{regularization_loss.1} parent=1 // pred_region
      %v99 = vld [vmem:[#allocation2] sm:$0xff]
      %v100 = vld [vmem:[#allocation2 + $0x8] sm:$0xff]
      %v101 = vld [vmem:[#allocation2 + $0x10] sm:$0xff]
      %v102 = vld [vmem:[#allocation2 + $0x18] sm:$0xff]
      %v103 = vld [vmem:[#allocation2 + $0x20] sm:$0xff]
      %v104 = vld [vmem:[#allocation2 + $0x28] sm:$0xff]
      %v105 = vld [vmem:[#allocation2 + $0x30] sm:$0xff]
      %v106 = vld [vmem:[#allocation2 + $0x38] sm:$0xff]
      %v107 = vld [vmem:[#allocation2 + $0x40] sm:$0xff]
      %v108 = vadd.f32 %v99, %v100
      %v109 = vadd.f32 %v108, %v101
      %v110 = vadd.f32 %v109, %v102
      %v111 = vadd.f32 %v110, %v103
      %v112 = vadd.f32 %v111, %v104
      %v113 = vadd.f32 %v112, %v105
      %v114 = vadd.f32 %v113, %v106
      %v115 = vadd.f32 %v114, %v107
      %116 = vadd.xlane.f32.xlu0 %v115
      %v117 = vpop.xlane.xlu0 %116
      %v118 = vld [vmem:[%s0] sm:$0xff]
      %vm119 = vcmp.gt.f32.partialorder %v118, 0.0
      %v120 = vmul.f32 %v118, %v117
      %v121 = vsel %vm119, %v120, 0.0
      %vm122 = vcmask 7168
      %v123 = vsel %vm122, %v121, 0.0
      %124 = vadd.xlane.f32.xlu0 %v123
      %v125 = vpop.xlane.xlu0 %124
      %v126 = vrot.slane %v125, 4
      %v127 = vadd.f32 %v125, %v126
      %v128 = vrot.slane %v127, 2
      %v129 = vadd.f32 %v127, %v128
      %v130 = vrot.slane %v129, 1
      %v131 = vadd.f32 %v129, %v130
      %s132 = vtos %v131
      %s133 = smul.f32 %s132, -0.00086805556
      %s134 = scalar_lea.smem [#allocation6], 0
      %135 = sst [smem:[%s134]] %s133
    $region21: #{regularization_loss.1} parent=1 // pred_fallthru
      _
    // Predicated region
    $region22: #{regularization_loss.1} parent=1 // pred_check
      _
    $region23: #{regularization_loss.1} parent=1 // pred_check_branch
      %137 = sbr.rel (0) target = $region25
    $region24: #{regularization_loss.1} parent=1 // pred_region
      %s139 = ssub.s32 16, 16
      %140 = vsyncadd [#allocation5], %s139
      %143 = dma.smem_to_hbm [#allocation6], 16, %s2, [#allocation5]
    $region25: #{regularization_loss.1} parent=1 // pred_fallthru
      _
    // Predicated region
    $region26: #{regularization_loss.1} parent=1 // pred_check
      _
    $region27: #{regularization_loss.1} parent=1 // pred_check_branch
      %145 = sbr.rel (0) target = $region29
    $region28: #{regularization_loss.1} parent=1 // pred_region
      %146 = dma.done [#allocation5], 16
    $region29: #{regularization_loss.1} parent=1 // pred_fallthru
      _
    %147 = sfence
    %148 = vsyncpa [#allocation4], 1
    %149 = vsyncpa [#allocation5], 1

</llo_original>
